<compile_context>
chip_gen: v6e
topology: v6e:2x2x1
jax: 0.10.0
libtpu: 0.0.40
codegen_flags: <defaults>
</compile_context>

<pallas_src>
import jax
import jax.numpy as jnp
from jax import lax
from jax.experimental import pallas as pl
from jax.experimental.pallas import tpu as pltpu


def _round_up(x: int, m: int) -> int:
    return ((x + m - 1) // m) * m


def _final_proj_kernel(x_ref, w_ref, b_ref, o_ref):
    # x_ref: (tm, Qp)     latents tile (task t, batch tile i), compute dtype
    # w_ref: (1, tn, Qp)  weight tile (task t, logits tile j) in PyTorch [L, Q] layout
    # b_ref: (1, 1, tn)   bias tile (f32)
    # o_ref: (tm, tn)
    x = x_ref[...]
    w = w_ref[0]
    # Contract Q of x against Q of w directly — the MXU consumes the transposed RHS
    # natively, so no pre-transposed weight copy is ever materialized in HBM.
    acc = lax.dot_general(
        x, w,
        dimension_numbers=(((1,), (1,)), ((), ())),
        preferred_element_type=jnp.float32,
    )                                              # (tm, tn) f32
    acc = acc + b_ref[0].astype(jnp.float32)
    o_ref[...] = acc.astype(o_ref.dtype)


def final_proj(latents, weights, biases, *, compute_dtype=None):
    """Pallas implementation of FinalProj.forward.

    latents: [B, n_tasks, Q]
    weights: [n_tasks, L, Q]   (PyTorch nn.Linear weight layout per task — NOT transposed)
    biases:  [n_tasks, L]
    returns: [B, n_tasks, L]   (dtype of latents)
    """
    B, n_tasks, Q = latents.shape
    L = weights.shape[1]
    out_dtype = latents.dtype
    if compute_dtype is None:
        compute_dtype = latents.dtype

    # ---- alignment & tile selection ---------------------------------------
    Qp = _round_up(Q, 128)                  # lane-aligned contraction dim
    Lp = _round_up(L, 128)                  # lane-aligned output dim
    tm = min(_round_up(B, 8), 512)          # batch tile (sublane aligned)
    tn = min(Lp, 512)                       # logits tile (multiple of 128 -> lane-dense stores)
    Bp = _round_up(B, tm)
    Lpp = _round_up(Lp, tn)
    nB = Bp // tm
    nL = Lpp // tn

    # ---- zero-cost layout plumbing (pads are no-ops when already aligned) --
    x = jnp.pad(latents, ((0, Bp - B), (0, 0), (0, Qp - Q))).astype(compute_dtype)
    x2d = x.reshape(Bp, n_tasks * Qp)                       # free (contiguous) reshape

    w = jnp.pad(weights, ((0, 0), (0, Lpp - L), (0, Qp - Q))).astype(compute_dtype)

    b = jnp.pad(biases.astype(jnp.float32), ((0, 0), (0, Lpp - L)))
    b3d = b.reshape(n_tasks, 1, Lpp)

    # ---- VMEM budget (double-buffered blocks) & cost hint ------------------
    in_itemsize = jnp.dtype(compute_dtype).itemsize
    out_itemsize = jnp.dtype(out_dtype).itemsize
    block_bytes = (tm * Qp + tn * Qp) * in_itemsize + tn * 4 + tm * tn * out_itemsize
    vmem_limit = int(min(max(3 * block_bytes + (4 << 20), 32 << 20), 56 << 20))

    cost = pl.CostEstimate(
        flops=2 * n_tasks * Bp * Qp * Lpp,
        transcendentals=0,
        bytes_accessed=int(
            x2d.size * in_itemsize
            + w.size * in_itemsize
            + b3d.size * 4
            + Bp * n_tasks * Lpp * out_itemsize
        ),
    )

    out2d = pl.pallas_call(
        _final_proj_kernel,
        out_shape=jax.ShapeDtypeStruct((Bp, n_tasks * Lpp), out_dtype),
        grid_spec=pltpu.PrefetchScalarGridSpec(
            num_scalar_prefetch=0,
            # B-tile axis innermost: the (tn, Qp) weight block index does not depend
            # on it, so the weight tile stays VMEM-resident across all batch tiles.
            grid=(n_tasks, nL, nB),
            in_specs=[
                pl.BlockSpec((tm, Qp), lambda t, j, i: (i, t)),
                pl.BlockSpec((1, tn, Qp), lambda t, j, i: (t, j, 0)),
                pl.BlockSpec((1, 1, tn), lambda t, j, i: (t, 0, j)),
            ],
            out_specs=pl.BlockSpec((tm, tn), lambda t, j, i: (i, t * nL + j)),
        ),
        compiler_params=pltpu.CompilerParams(
            dimension_semantics=("parallel", "parallel", "arbitrary"),
            vmem_limit_bytes=vmem_limit,
        ),
        cost_estimate=cost,
    )(x2d, w, b3d)

    out = out2d.reshape(Bp, n_tasks, Lpp)[:B, :, :L]        # free when aligned
    return out


def init_params(key, n_tasks, queries_dim, logits_dim, dtype=jnp.float32):
    """Deterministic synthetic init (uniform, like torch.nn.Linear's default scale)."""
    kw, kb = jax.random.split(key)
    bound = 1.0 / jnp.sqrt(queries_dim)
    weights = jax.random.uniform(
        kw, (n_tasks, logits_dim, queries_dim), dtype=dtype, minval=-bound, maxval=bound
    )
    biases = jax.random.uniform(
        kb, (n_tasks, logits_dim), dtype=dtype, minval=-bound, maxval=bound
    )
    return weights, biases


if __name__ == "__main__":
    B, n_tasks, queries_dim, logits_dim = 2, 4, 32, 16

    key = jax.random.PRNGKey(0)
    k_x, k_p = jax.random.split(key)

    latents = jax.random.normal(k_x, (B, n_tasks, queries_dim), dtype=jnp.float32)
    weights, biases = init_params(k_p, n_tasks, queries_dim, logits_dim)

    # f32 path (matches PyTorch numerics).
    out = jax.block_until_ready(final_proj(latents, weights, biases))

    # Pure-JAX reference (per-task linear, stacked along axis=1).
    ref = jnp.stack(
        [latents[:, i, :] @ weights[i].T + biases[i] for i in range(n_tasks)],
        axis=1,
    )
    assert out.shape == (B, n_tasks, logits_dim)
    assert jnp.allclose(out, ref, atol=1e-5, rtol=1e-5)

    # bf16 compute path (bandwidth-optimized; f32 accumulate, looser tolerance).
    out_bf16 = jax.block_until_ready(
        final_proj(latents, weights, biases, compute_dtype=jnp.bfloat16)
    )
    assert out_bf16.shape == (B, n_tasks, logits_dim)
    assert jnp.allclose(out_bf16, ref, atol=5e-2, rtol=5e-2)

    print("KERNEL_OK")
</pallas_src>

<mosaic_0001>
module attributes {stable_mosaic.version = 11 : i64} {
  func.func @_final_proj_kernel(%arg0: i32, %arg1: i32, %arg2: i32, %arg3: memref<8x128xf32, #tpu.memory_space<vmem>>, %arg4: memref<1x128x128xf32, #tpu.memory_space<vmem>>, %arg5: memref<1x1x128xf32, #tpu.memory_space<vmem>>, %arg6: memref<8x128xf32, #tpu.memory_space<vmem>>) attributes {dimension_semantics = [#tpu.dimension_semantics<parallel>, #tpu.dimension_semantics<parallel>, #tpu.dimension_semantics<arbitrary>], iteration_bounds = array<i64: 4, 1, 1>, scalar_prefetch = 0 : i64, scratch_operands = 0 : i64, tpu.core_type = #tpu.core_type<tc>, window_params = [{transform_indices = @transform_0, window_bounds = array<i64: 8, 128>}, {transform_indices = @transform_1, window_bounds = array<i64: 1, 128, 128>}, {transform_indices = @transform_2, window_bounds = array<i64: 1, 1, 128>}, {transform_indices = @transform_3, window_bounds = array<i64: 8, 128>}]} {
    %c0 = arith.constant 0 : index
    %c0_0 = arith.constant 0 : index
    %0 = vector.load %arg3[%c0, %c0_0] : memref<8x128xf32, #tpu.memory_space<vmem>>, vector<8x128xf32>
    %c0_1 = arith.constant 0 : index
    %c0_2 = arith.constant 0 : index
    %c0_3 = arith.constant 0 : index
    %1 = vector.load %arg4[%c0_1, %c0_2, %c0_3] : memref<1x128x128xf32, #tpu.memory_space<vmem>>, vector<1x128x128xf32>
    %2 = vector.shape_cast %1 : vector<1x128x128xf32> to vector<128x128xf32>
    %cst = arith.constant dense<0.000000e+00> : vector<8x128xf32>
    %3 = tpu.matmul %0, %2, %cst {dimension_numbers = #tpu.dot_dimension_numbers<[1], [1], [0], [0], [0, 0, 1, 0], [], []>} : vector<8x128xf32>, vector<128x128xf32>, vector<8x128xf32> -> vector<8x128xf32>
    %c0_4 = arith.constant 0 : index
    %c0_5 = arith.constant 0 : index
    %c0_6 = arith.constant 0 : index
    %4 = vector.load %arg5[%c0_4, %c0_5, %c0_6] : memref<1x1x128xf32, #tpu.memory_space<vmem>>, vector<1x1x128xf32>
    %5 = vector.shape_cast %4 : vector<1x1x128xf32> to vector<1x128xf32>
    %6 = vector.broadcast %5 : vector<1x128xf32> to vector<8x128xf32>
    %7 = arith.addf %3, %6 : vector<8x128xf32>
    %c0_7 = arith.constant 0 : index
    %c0_8 = arith.constant 0 : index
    %8 = vector.load %arg6[%c0_7, %c0_8] : memref<8x128xf32, #tpu.memory_space<vmem>>, vector<8x128xf32>
    tpu.vector_store %arg6[%c0_7, %c0_8], %7 {strides = array<i32>} : memref<8x128xf32, #tpu.memory_space<vmem>>, vector<8x128xf32>,
    return
  }
  func.func @transform_0(%arg0: i32, %arg1: i32, %arg2: i32) -> (i32, i32) {
    %c0_i32 = arith.constant 0 : i32
    return %arg2, %arg0 : i32, i32
  }
  func.func @transform_1(%arg0: i32, %arg1: i32, %arg2: i32) -> (i32, i32, i32) {
    %c0_i32 = arith.constant 0 : i32
    %c0_i32_0 = arith.constant 0 : i32
    return %arg0, %arg1, %c0_i32 : i32, i32, i32
  }
  func.func @transform_2(%arg0: i32, %arg1: i32, %arg2: i32) -> (i32, i32, i32) {
    %c0_i32 = arith.constant 0 : i32
    %c0_i32_0 = arith.constant 0 : i32
    return %arg0, %c0_i32, %arg1 : i32, i32, i32
  }
  func.func @transform_3(%arg0: i32, %arg1: i32, %arg2: i32) -> (i32, i32) {
    %c1_i32 = arith.constant 1 : i32
    %0 = arith.muli %arg0, %c1_i32 : i32
    %1 = arith.addi %0, %arg1 : i32
    %c0_i32 = arith.constant 0 : i32
    return %arg2, %1 : i32, i32
  }
}

</mosaic_0001>

<llo_original>
// kernel: tpu_custom_call.1
$region0: #{tpu_custom_call.1}
  #allocation0 [shape = 'u32[]', space=smem, size = 0x4, offset = 0x4, fixed_abs, tag = 'smem constant byte address 0x4 - core index']
  #allocation1 [shape = 'u32[144,128]{1,0:T(1,128)}', space=vmem, size = 0x12000, scoped, tag = 'internal scratch']
  %s0 = inlined_call_operand.hbm [shape: f32[8,512], index: 0, kind: input, shape index: {}]
  %s1 = inlined_call_operand.hbm [shape: f32[4,128,128], index: 1, kind: input, shape index: {}]
  %s2 = inlined_call_operand.hbm [shape: f32[4,1,128], index: 2, kind: input, shape index: {}]
  %s3 = inlined_call_operand.hbm [shape: f32[8,512], index: 3, kind: output, shape index: {}]
  %s4 = sld [smem:[#allocation0]]
  $region57: #{tpu_custom_call.1} parent=0
    _
  %s6 = ssub.s32 1, %s4
  %s7 = scalar_select 0, %s6, %s4
  $region1: #{tpu_custom_call.1} parent=0
    #allocation2 [shape = 'u8[8192]{0}', space=vmem, size = 0x2000, scoped, tag = 'input window, operand 0']
    #allocation3 [shape = 's32[2]{0}', space=sflag, size = 0x8, scoped, tag = 'scoped memory for tpu_custom_call.1']
    #allocation4 [shape = 's32[2]{0}', space=sflag, size = 0x8, scoped, tag = 'scoped memory for tpu_custom_call.1']
    #allocation5 [shape = 'u8[131072]{0}', space=vmem, size = 0x20000, scoped, tag = 'input window, operand 1']
    #allocation6 [shape = 's32[2]{0}', space=sflag, size = 0x8, scoped, tag = 'scoped memory for tpu_custom_call.1']
    #allocation7 [shape = 'u8[1024]{0}', space=vmem, size = 0x400, scoped, tag = 'input window, operand 2']
    #allocation8 [shape = 'u8[8192]{0}', space=vmem, size = 0x2000, scoped, tag = 'output window, operand 0']
    %8 = vsyncpa [#allocation3], 0
    %s9 = scalar_lea.sflag [#allocation3], 1
    %10 = vsyncpa %s9, 0
    %11 = vsyncpa [#allocation6], 0
    %s12 = scalar_lea.sflag [#allocation6], 1
    %13 = vsyncpa %s12, 0
    %14 = vsyncpa [#allocation4], 0
    %s15 = scalar_lea.sflag [#allocation4], 1
    %16 = vsyncpa %s15, 0
    loop: start=0, step=1, limit=6
    $region2: #{tpu_custom_call.1} parent=1 // loop_pre_header
      _
    $region3: #{tpu_custom_call.1} parent=1 // loop_header
      %s18 = sphi 0, %s22
      %p19 = scmp.ge.s32.totalorder %s18, 6
      %s25 = sphi 0, %s44
      %s26 = sphi 0, %s40
      %s27 = sphi 0, %s36
      %s28 = sphi 0, %s25
      %s29 = sphi 0, %s26
      %s30 = sphi 0, %s27
      %s31 = sphi 0, %s28
      %s32 = sphi 0, %s29
      %s33 = sphi 0, %s30
      %s49 = sphi 0, %s51
      %s52 = sphi 0, %s49
      %s53 = sphi 0, %s52
      %s69 = sphi 0, %s53
      %s77 = sphi 0, %s79
      %s80 = sphi 0, %s77
      %s81 = sphi 0, %s80
      %s97 = sphi 0, %s81
      %s105 = sphi 0, %s107
      %s108 = sphi 0, %s105
      %s109 = sphi 0, %s108
      %s125 = sphi 0, %s109
      %s135 = sphi 0, %s137
      %s138 = sphi 0, %s135
      %s139 = sphi 0, %s138
      %s155 = sphi 0, %s139
    $region4: #{tpu_custom_call.1} parent=1 // loop_header_branch
      %21 = sbr.rel (%p19) target = $region8
    $region5: #{tpu_custom_call.1} parent=1 // loop_body
      %s23 = ssub.s32 %s18, 1
      %s24 = ssub.s32 %s18, 2
      %s34 = sadd.s32 1, %s27
      %p35 = scmp.ge.s32.totalorder %s34, 1
      %s36 = scalar_select %p35, 0, %s34
      %s37 = sadd.s32 1, %s26
      %s38 = scalar_select %p35, %s37, %s26
      %p39 = scmp.ge.s32.totalorder %s38, 1
      %s40 = scalar_select %p39, 0, %s38
      %s41 = sadd.s32 1, %s25
      %s42 = scalar_select %p39, %s41, %s25
      %p43 = scmp.ge.s32.totalorder %s42, 4
      %s44 = scalar_select %p43, 0, %s42
      %s45 = ssub.s32 %s27, %s36
      %s46 = ssub.s32 %s25, %s44
      %s47 = sor.u32 %s45, %s46
      %p48 = scmp.eq.s32.totalorder %s47, 0
      %s50 = sadd.s32 %s49, 1
      %s51 = scalar_select %p48, %s49, %s50
      %p54 = pneg %p48
      %p55 = scmp.eq.s32.totalorder %s18, 3
      %p56 = por %p54, %p55
      %p57 = scmp.ne.s32.totalorder %s49, %s52
      %p58 = scmp.eq.s32.totalorder %s18, 0
      %p59 = por %p57, %p58
      %p60 = scmp.ne.s32.totalorder %s49, %s52
      %p61 = scmp.eq.s32.totalorder %s23, 3
      %p62 = por %p60, %p61
      %p63 = scmp.ne.s32.totalorder %s52, %s53
      %p64 = scmp.eq.s32.totalorder %s23, 0
      %p65 = por %p63, %p64
      %p66 = scmp.ne.s32.totalorder %s52, %s53
      %p67 = scmp.eq.s32.totalorder %s24, 3
      %p68 = por %p66, %p67
      %p70 = scmp.ne.s32.totalorder %s53, %s69
      %p71 = scmp.eq.s32.totalorder %s24, 0
      %p72 = por %p70, %p71
      %s73 = ssub.s32 %s25, %s44
      %s74 = ssub.s32 %s26, %s40
      %s75 = sor.u32 %s73, %s74
      %p76 = scmp.eq.s32.totalorder %s75, 0
      %s78 = sadd.s32 %s77, 1
      %s79 = scalar_select %p76, %s77, %s78
      %p82 = pneg %p76
      %p83 = scmp.eq.s32.totalorder %s18, 3
      %p84 = por %p82, %p83
      %p85 = scmp.ne.s32.totalorder %s77, %s80
      %p86 = scmp.eq.s32.totalorder %s18, 0
      %p87 = por %p85, %p86
      %p88 = scmp.ne.s32.totalorder %s77, %s80
      %p89 = scmp.eq.s32.totalorder %s23, 3
      %p90 = por %p88, %p89
      %p91 = scmp.ne.s32.totalorder %s80, %s81
      %p92 = scmp.eq.s32.totalorder %s23, 0
      %p93 = por %p91, %p92
      %p94 = scmp.ne.s32.totalorder %s80, %s81
      %p95 = scmp.eq.s32.totalorder %s24, 3
      %p96 = por %p94, %p95
      %p98 = scmp.ne.s32.totalorder %s81, %s97
      %p99 = scmp.eq.s32.totalorder %s24, 0
      %p100 = por %p98, %p99
      %s101 = ssub.s32 %s25, %s44
      %s102 = ssub.s32 %s26, %s40
      %s103 = sor.u32 %s101, %s102
      %p104 = scmp.eq.s32.totalorder %s103, 0
      %s106 = sadd.s32 %s105, 1
      %s107 = scalar_select %p104, %s105, %s106
      %p110 = pneg %p104
      %p111 = scmp.eq.s32.totalorder %s18, 3
      %p112 = por %p110, %p111
      %p113 = scmp.ne.s32.totalorder %s105, %s108
      %p114 = scmp.eq.s32.totalorder %s18, 0
      %p115 = por %p113, %p114
      %p116 = scmp.ne.s32.totalorder %s105, %s108
      %p117 = scmp.eq.s32.totalorder %s23, 3
      %p118 = por %p116, %p117
      %p119 = scmp.ne.s32.totalorder %s108, %s109
      %p120 = scmp.eq.s32.totalorder %s23, 0
      %p121 = por %p119, %p120
      %p122 = scmp.ne.s32.totalorder %s108, %s109
      %p123 = scmp.eq.s32.totalorder %s24, 3
      %p124 = por %p122, %p123
      %p126 = scmp.ne.s32.totalorder %s109, %s125
      %p127 = scmp.eq.s32.totalorder %s24, 0
      %p128 = por %p126, %p127
      %s129 = sadd.s32 %s25, %s26
      %s130 = sadd.s32 %s44, %s40
      %s131 = ssub.s32 %s27, %s36
      %s132 = ssub.s32 %s129, %s130
      %s133 = sor.u32 %s131, %s132
      %p134 = scmp.eq.s32.totalorder %s133, 0
      %s136 = sadd.s32 %s135, 1
      %s137 = scalar_select %p134, %s135, %s136
      %p140 = pneg %p134
      %p141 = scmp.eq.s32.totalorder %s18, 3
      %p142 = por %p140, %p141
      %p143 = scmp.ne.s32.totalorder %s135, %s138
      %p144 = scmp.eq.s32.totalorder %s18, 0
      %p145 = por %p143, %p144
      %p146 = scmp.ne.s32.totalorder %s135, %s138
      %p147 = scmp.eq.s32.totalorder %s23, 3
      %p148 = por %p146, %p147
      %p149 = scmp.ne.s32.totalorder %s138, %s139
      %p150 = scmp.eq.s32.totalorder %s23, 0
      %p151 = por %p149, %p150
      %p152 = scmp.ne.s32.totalorder %s138, %s139
      %p153 = scmp.eq.s32.totalorder %s24, 3
      %p154 = por %p152, %p153
      %p156 = scmp.ne.s32.totalorder %s139, %s155
      %p157 = scmp.eq.s32.totalorder %s24, 0
      %p158 = por %p156, %p157
      %p159 = scmp.le.s32.totalorder 1, %s18
      %p160 = scmp.lt.s32.totalorder %s18, 5
      %p161 = pnand %p159, %p160
      %p162 = pneg %p161
      // Predicated region
      $region9: #{tpu_custom_call.1} parent=5 // pred_check
        _
      $region10: #{tpu_custom_call.1} parent=5 // pred_check_branch
        %164 = sbr.rel (%p161) target = $region12
      $region11: #{tpu_custom_call.1} parent=5 // pred_region
        %s165 = ssub.s32 %s18, 1
      $region12: #{tpu_custom_call.1} parent=5 // pred_fallthru
        _
      %p166 = scmp.lt.s32.totalorder %s18, 4
      // Predicated region
      $region13: #{tpu_custom_call.1} parent=5 // pred_check
        %p167 = pneg %p166
      $region14: #{tpu_custom_call.1} parent=5 // pred_check_branch
        %169 = sbr.rel (%p167) target = $region16
      $region15: #{tpu_custom_call.1} parent=5 // pred_region
        // Predicated region
        $region17: #{tpu_custom_call.1} parent=15 // pred_check
          %p170 = pneg %p59
        $region18: #{tpu_custom_call.1} parent=15 // pred_check_branch
          %172 = sbr.rel (%p170) target = $region20
        $region19: #{tpu_custom_call.1} parent=15 // pred_region
          %s173 = sand.u32 %s49, 1
          %s174 = scalar_lea.sflag [#allocation3], %s173
          %s175 = sand.u32 %s49, 1
          %s176 = smul.addr %s175, 8
          %s177 = scalar_lea.vmem [#allocation2], %s176
          %s179 = ssub.s32 128, 128
          %180 = vsyncadd %s174, %s179
          %s181 = smul.addr %s27, 4
          %s182 = sadd.s32 %s25, %s181
          %s183 = smul.addr %s182, 128
          %s184 = scalar_lea.hbm %s0, %s183
          %s186 = sshll.u32 %s177, 4
          %s187 = int_to_ptr.vmem [resolvable:$true] %s186
          %189 = dma.hbm_to_vmem [thread:$0]  %s184, 128, %s187, %s174
        $region20: #{tpu_custom_call.1} parent=15 // pred_fallthru
          _
        // Predicated region
        $region21: #{tpu_custom_call.1} parent=15 // pred_check
          %p190 = pneg %p87
        $region22: #{tpu_custom_call.1} parent=15 // pred_check_branch
          %192 = sbr.rel (%p190) target = $region24
        $region23: #{tpu_custom_call.1} parent=15 // pred_region
          %s193 = sand.u32 %s18, 1
          %s194 = scalar_lea.sflag [#allocation6], %s193
          %s195 = sand.u32 %s77, 1
          %s196 = smul.addr %s195, 128
          %s197 = scalar_lea.vmem [#allocation5], %s196
          %s198 = smul.u32 16, %s26
          %s200 = ssub.s32 2048, 2048
          %201 = vsyncadd %s194, %s200
          %s202 = smul.addr %s25, 16
          %s203 = sadd.s32 %s198, %s202
          %s204 = smul.addr %s203, 128
          %s205 = scalar_lea.hbm %s1, %s204
          %s206 = sshll.u32 %s197, 4
          %s207 = int_to_ptr.vmem [resolvable:$true] %s206
          %212 = dma.hbm_to_vmem [thread:$0]  %s205, 2048, %s207, %s194, 128, 128, 8
        $region24: #{tpu_custom_call.1} parent=15 // pred_fallthru
          _
        // Predicated region
        $region25: #{tpu_custom_call.1} parent=15 // pred_check
          %p213 = pneg %p115
        $region26: #{tpu_custom_call.1} parent=15 // pred_check_branch
          %215 = sbr.rel (%p213) target = $region28
        $region27: #{tpu_custom_call.1} parent=15 // pred_region
          %s216 = sand.u32 %s18, 1
          %s217 = scalar_lea.sflag [#allocation6], %s216
          %s218 = sand.u32 %s105, 1
          %s219 = scalar_lea.vmem [#allocation7], %s218
          %s221 = ssub.s32 16, 16
          %222 = vsyncadd %s217, %s221
          %s223 = sadd.s32 %s26, %s25
          %s224 = smul.addr %s223, 16
          %s225 = scalar_lea.hbm %s2, %s224
          %s227 = sshll.u32 %s219, 4
          %s228 = int_to_ptr.vmem [resolvable:$true] %s227
          %230 = dma.hbm_to_vmem [thread:$0]  %s225, 16, %s228, %s217
        $region28: #{tpu_custom_call.1} parent=15 // pred_fallthru
          _
      $region16: #{tpu_custom_call.1} parent=5 // pred_fallthru
        _
      %p231 = scmp.le.s32.totalorder 1, %s18
      %p232 = scmp.lt.s32.totalorder %s18, 5
      %p233 = pnand %p231, %p232
      %p234 = pneg %p233
      // Predicated region
      $region29: #{tpu_custom_call.1} parent=5 // pred_check
        _
      $region30: #{tpu_custom_call.1} parent=5 // pred_check_branch
        %236 = sbr.rel (%p233) target = $region32
      $region31: #{tpu_custom_call.1} parent=5 // pred_region
        %s237 = ssub.s32 %s18, 1
        %s238 = sand.u32 %s52, 1
        %s239 = scalar_lea.sflag [#allocation3], %s238
        %s240 = sand.u32 %s52, 1
        %s241 = smul.addr %s240, 8
        %s242 = scalar_lea.vmem [#allocation2], %s241
        // Predicated region
        $region33: #{tpu_custom_call.1} parent=31 // pred_check
          %p243 = pneg %p65
        $region34: #{tpu_custom_call.1} parent=31 // pred_check_branch
          %245 = sbr.rel (%p243) target = $region36
        $region35: #{tpu_custom_call.1} parent=31 // pred_region
          %246 = dma.done %s239, 128
        $region36: #{tpu_custom_call.1} parent=31 // pred_fallthru
          _
        %s247 = sand.u32 %s23, 1
        %s248 = scalar_lea.sflag [#allocation6], %s247
        %s249 = sand.u32 %s80, 1
        %s250 = smul.addr %s249, 128
        %s251 = scalar_lea.vmem [#allocation5], %s250
        // Predicated region
        $region37: #{tpu_custom_call.1} parent=31 // pred_check
          %p252 = pneg %p93
        $region38: #{tpu_custom_call.1} parent=31 // pred_check_branch
          %254 = sbr.rel (%p252) target = $region40
        $region39: #{tpu_custom_call.1} parent=31 // pred_region
          %255 = dma.done %s248, 2048
        $region40: #{tpu_custom_call.1} parent=31 // pred_fallthru
          _
        %s256 = sand.u32 %s23, 1
        %s257 = scalar_lea.sflag [#allocation6], %s256
        %s258 = sand.u32 %s108, 1
        %s259 = scalar_lea.vmem [#allocation7], %s258
        // Predicated region
        $region41: #{tpu_custom_call.1} parent=31 // pred_check
          %p260 = pneg %p121
        $region42: #{tpu_custom_call.1} parent=31 // pred_check_branch
          %262 = sbr.rel (%p260) target = $region44
        $region43: #{tpu_custom_call.1} parent=31 // pred_region
          %263 = dma.done %s257, 16
        $region44: #{tpu_custom_call.1} parent=31 // pred_fallthru
          _
        %s264 = sand.u32 %s52, 1
        %s265 = scalar_lea.sflag [#allocation3], %s264
        %s266 = sand.u32 %s52, 1
        %s267 = smul.addr %s266, 8
        %s268 = scalar_lea.vmem [#allocation2], %s267
        %p269 = pneg %p65
        %p270 = pneg %p62
        %s271 = sand.u32 %s23, 1
        %s272 = scalar_lea.sflag [#allocation6], %s271
        %s273 = sand.u32 %s80, 1
        %s274 = smul.addr %s273, 128
        %s275 = scalar_lea.vmem [#allocation5], %s274
        %p276 = pneg %p93
        %p277 = pneg %p90
        %s278 = sand.u32 %s23, 1
        %s279 = scalar_lea.sflag [#allocation6], %s278
        %s280 = sand.u32 %s108, 1
        %s281 = scalar_lea.vmem [#allocation7], %s280
        %p282 = pneg %p121
        %p283 = pneg %p118
        %p284 = pneg %p151
        %p285 = pneg %p148
        %s286 = sand.u32 %s138, 1
        %s287 = scalar_lea.sflag [#allocation4], %s286
        %s288 = sand.u32 %s138, 1
        %s289 = smul.addr %s288, 8
        %s290 = scalar_lea.vmem [#allocation8], %s289
        %s291 = smul.u32 16, %s29
        %s292 = sadd.s32 %s28, %s29
        %v293 = vld [vmem:[%s242] sm:$0xff]
        %v294 = vld [vmem:[%s251] sm:$0xff]
        %v295 = vld [vmem:[%s251 + $0x8] sm:$0xff]
        %v296 = vld [vmem:[%s251 + $0x10] sm:$0xff]
        %v297 = vld [vmem:[%s251 + $0x18] sm:$0xff]
        %v298 = vld [vmem:[%s251 + $0x20] sm:$0xff]
        %v299 = vld [vmem:[%s251 + $0x28] sm:$0xff]
        %v300 = vld [vmem:[%s251 + $0x30] sm:$0xff]
        %v301 = vld [vmem:[%s251 + $0x38] sm:$0xff]
        %v302 = vld [vmem:[%s251 + $0x40] sm:$0xff]
        %v303 = vld [vmem:[%s251 + $0x48] sm:$0xff]
        %v304 = vld [vmem:[%s251 + $0x50] sm:$0xff]
        %v305 = vld [vmem:[%s251 + $0x58] sm:$0xff]
        %v306 = vld [vmem:[%s251 + $0x60] sm:$0xff]
        %v307 = vld [vmem:[%s251 + $0x68] sm:$0xff]
        %v308 = vld [vmem:[%s251 + $0x70] sm:$0xff]
        %v309 = vld [vmem:[%s251 + $0x78] sm:$0xff]
        %v310 = vld [vmem:[%s259] sm:$0x1]
        %v312 = vlaneseq
        %v313 = vshrl.u32 %v312, 7
        %v314 = vsub.s32 0, %v313
        %v315 = vrot.slane %v310, %v314
        %317 = vmatprep.subr.mxu0 0.0
        %318 = vmatpush1.xpose.msra.mxu0 %v309
        %319 = vmatprep.subr.mxu0 0.0
        %320 = vmatpush1.xpose.msra.mxu0 %v308
        %321 = vmatprep.subr.mxu0 0.0
        %322 = vmatpush1.xpose.msra.mxu0 %v307
        %323 = vmatprep.subr.mxu0 0.0
        %324 = vmatpush1.xpose.msra.mxu0 %v306
        %325 = vmatprep.subr.mxu0 0.0
        %326 = vmatpush1.xpose.msra.mxu0 %v305
        %327 = vmatprep.subr.mxu0 0.0
        %328 = vmatpush1.xpose.msra.mxu0 %v304
        %329 = vmatprep.subr.mxu0 0.0
        %330 = vmatpush1.xpose.msra.mxu0 %v303
        %331 = vmatprep.subr.mxu0 0.0
        %332 = vmatpush1.xpose.msra.mxu0 %v302
        %333 = vmatprep.subr.mxu0 0.0
        %334 = vmatpush1.xpose.msra.mxu0 %v301
        %335 = vmatprep.subr.mxu0 0.0
        %336 = vmatpush1.xpose.msra.mxu0 %v300
        %337 = vmatprep.subr.mxu0 0.0
        %338 = vmatpush1.xpose.msra.mxu0 %v299
        %339 = vmatprep.subr.mxu0 0.0
        %340 = vmatpush1.xpose.msra.mxu0 %v298
        %341 = vmatprep.subr.mxu0 0.0
        %342 = vmatpush1.xpose.msra.mxu0 %v297
        %343 = vmatprep.subr.mxu0 0.0
        %344 = vmatpush1.xpose.msra.mxu0 %v296
        %345 = vmatprep.subr.mxu0 0.0
        %346 = vmatpush1.xpose.msra.mxu0 %v295
        %347 = vmatprep.subr.mxu0 0.0
        %348 = vmatpush1.xpose.msra.mxu0 %v294
        %349 = vmatprep.subr.mxu0 0.0
        %350 = vmatpush2.xpose.msra.mxu0 0.0
        %351 = vmatprep.subr.mxu0 0.0
        %352 = vmatpush2.xpose.msra.mxu0 0.0
        %353 = vmatprep.subr.mxu0 0.0
        %354 = vmatpush2.xpose.msra.mxu0 0.0
        %355 = vmatprep.subr.mxu0 0.0
        %356 = vmatpush2.xpose.msra.mxu0 0.0
        %357 = vmatprep.subr.mxu0 0.0
        %358 = vmatpush2.xpose.msra.mxu0 0.0
        %359 = vmatprep.subr.mxu0 0.0
        %360 = vmatpush2.xpose.msra.mxu0 0.0
        %361 = vmatprep.subr.mxu0 0.0
        %362 = vmatpush2.xpose.msra.mxu0 0.0
        %363 = vmatprep.subr.mxu0 0.0
        %364 = vmatpush2.xpose.msra.mxu0 0.0
        %365 = vmatprep.subr.mxu0 0.0
        %366 = vmatpush2.xpose.msra.mxu0 0.0
        %367 = vmatprep.subr.mxu0 0.0
        %368 = vmatpush2.xpose.msra.mxu0 0.0
        %369 = vmatprep.subr.mxu0 0.0
        %370 = vmatpush2.xpose.msra.mxu0 0.0
        %371 = vmatprep.subr.mxu0 0.0
        %372 = vmatpush2.xpose.msra.mxu0 0.0
        %373 = vmatprep.subr.mxu0 0.0
        %374 = vmatpush2.xpose.msra.mxu0 0.0
        %375 = vmatprep.subr.mxu0 0.0
        %376 = vmatpush2.xpose.msra.mxu0 0.0
        %377 = vmatprep.subr.mxu0 0.0
        %378 = vmatpush2.xpose.msra.mxu0 0.0
        %379 = vmatprep.subr.mxu0 0.0
        %380 = vmatpush2.xpose.msra.mxu0 0.0
        %381 = vmatprep.mubr.f32.mxu0 0.0
        %382 = vmatmul.mubr.f32.gmra.mxu0 %v293
        %v383 = vpop.f32.mrf.mxu0
        %v384 = vadd.f32 %v315, %v383
        %v385 = vpop.f32.mrf.mxu0
        %386 = vdwg.mxu0
        %387 = vst [vmem:[%s290] sm:$0xff] %v384
        %s388 = sand.u32 %s138, 1
        %s389 = scalar_lea.sflag [#allocation4], %s388
        %s390 = sand.u32 %s138, 1
        %s391 = smul.addr %s390, 8
        %s392 = scalar_lea.vmem [#allocation8], %s391
        // Predicated region
        $region45: #{tpu_custom_call.1} parent=31 // pred_check
          %p393 = pneg %p148
        $region46: #{tpu_custom_call.1} parent=31 // pred_check_branch
          %395 = sbr.rel (%p393) target = $region48
        $region47: #{tpu_custom_call.1} parent=31 // pred_region
          %s396 = sadd.s32 %s28, %s29
          %s398 = ssub.s32 128, 128
          %399 = vsyncadd %s389, %s398
          %s400 = smul.addr %s30, 4
          %s401 = sadd.s32 %s396, %s400
          %s402 = smul.addr %s401, 128
          %s403 = scalar_lea.hbm %s3, %s402
          %s405 = sshll.u32 %s392, 4
          %s406 = int_to_ptr.vmem [resolvable:$true] %s405
          %408 = dma.vmem_to_hbm [thread:$0]  %s406, 128, %s403, %s389
        $region48: #{tpu_custom_call.1} parent=31 // pred_fallthru
          _
      $region32: #{tpu_custom_call.1} parent=5 // pred_fallthru
        _
      %p409 = scmp.le.s32.totalorder 2, %s18
      // Predicated region
      $region49: #{tpu_custom_call.1} parent=5 // pred_check
        %p410 = pneg %p409
      $region50: #{tpu_custom_call.1} parent=5 // pred_check_branch
        %412 = sbr.rel (%p410) target = $region52
      $region51: #{tpu_custom_call.1} parent=5 // pred_region
        %s413 = ssub.s32 %s18, 2
        // Predicated region
        $region53: #{tpu_custom_call.1} parent=51 // pred_check
          %p414 = pneg %p154
        $region54: #{tpu_custom_call.1} parent=51 // pred_check_branch
          %416 = sbr.rel (%p414) target = $region56
        $region55: #{tpu_custom_call.1} parent=51 // pred_region
          %s417 = sand.u32 %s139, 1
          %s418 = scalar_lea.sflag [#allocation4], %s417
          %s419 = sand.u32 %s139, 1
          %s420 = smul.addr %s419, 8
          %s421 = scalar_lea.vmem [#allocation8], %s420
          %422 = dma.done %s418, 128
        $region56: #{tpu_custom_call.1} parent=51 // pred_fallthru
          _
      $region52: #{tpu_custom_call.1} parent=5 // pred_fallthru
        _
    $region6: #{tpu_custom_call.1} parent=1 // loop_footer
      %s22 = sadd.s32 1, %s18
    $region7: #{tpu_custom_call.1} parent=1 // loop_footer_branch
      %17 = sbr.rel target = $region3
    $region8: #{tpu_custom_call.1} parent=1 // loop_exit
      _
    %423 = vsyncpa [#allocation3], 1
    %s424 = scalar_lea.sflag [#allocation3], 1
    %425 = vsyncpa %s424, 1
    %426 = vsyncpa [#allocation6], 1
    %s427 = scalar_lea.sflag [#allocation6], 1
    %428 = vsyncpa %s427, 1
    %429 = vsyncpa [#allocation4], 1
    %s430 = scalar_lea.sflag [#allocation4], 1
    %431 = vsyncpa %s430, 1

</llo_original>
